<compile_context>
chip_gen: v6e
topology: v6e:2x2x1
jax: 0.10.0
libtpu: 0.0.40
codegen_flags: <defaults>
</compile_context>

<pallas_src>
import functools

import jax
import jax.numpy as jnp
from jax import lax
from jax.experimental import pallas as pl
from jax.experimental.pallas import tpu as pltpu


# ----------------------------- VMEM budgeting ------------------------------ #

def _vmem_capacity_bytes():
    try:
        return int(pltpu.get_tpu_info().vmem_capacity_bytes)
    except Exception:                      # older jax / interpret fallback
        return 128 * 2 ** 20


def _vmem_budget_bytes():
    # Stay well under physical per-TC VMEM (v7x has only 64 MiB total).
    return int(min(48 * 2 ** 20, _vmem_capacity_bytes() * 0.6))


def _vmem_limit_bytes(est_bytes):
    cap = _vmem_capacity_bytes()
    return int(min(int(cap * 0.85), max(32 * 2 ** 20, 2 * est_bytes)))


def _pick_time_chunk(seq_len, bsz, fixed_bytes, per_step_bytes, budget, target=32):
    """Largest time chunk <= target dividing seq_len, 8-aligned rows, in budget."""
    cands = [t for t in range(1, seq_len + 1)
             if seq_len % t == 0 and (t * bsz) % 8 == 0]
    if not cands:
        return seq_len
    ok = [t for t in cands if fixed_bytes + t * per_step_bytes <= budget]
    if not ok:
        ok = [min(cands)]
    pool = [t for t in ok if t <= target] or [min(ok)]
    return max(pool)


def _pick_row_tile(n_rows, fixed_bytes, per_row_bytes, budget, target=512):
    """Largest 8-aligned row tile dividing N, in budget, preferring >= 2 tiles
    so the "parallel" row axis gives both v7x TensorCores work."""
    cands = [t for t in range(8, n_rows + 1, 8) if n_rows % t == 0]
    if not cands:
        return n_rows
    ok = [t for t in cands if fixed_bytes + t * per_row_bytes <= budget]
    if not ok:
        ok = [min(cands)]
    pref = [t for t in ok if t <= target and n_rows // t >= 2]
    pool = pref or ok
    return max(pool)


# ----------------------------- Kernel 1: RNN ------------------------------ #

def rnn_chunk_kernel(t_chunk, bsz, embf_ref, h0_ref, wihT_ref, bsum_ref,
                     whhT_ref, hprev_ref, dpos_ref, h_sc, xw_sc, hall_sc):
    tb = t_chunk * bsz

    @pl.when(pl.program_id(0) == 0)
    def _():
        h_sc[...] = h0_ref[...]

    # Whole-chunk input projection in a single MXU pass (b_ih + b_hh presummed).
    xw_sc[...] = (
        jnp.dot(embf_ref[...], wihT_ref[...], preferred_element_type=jnp.float32)
        + bsum_ref[...])

    # hall_sc rows: [0:bsz] = chunk-start hidden, [(t+1)*bsz:(t+2)*bsz] = h_t.
    hall_sc[pl.ds(0, bsz), :] = h_sc[...]
    whhT = whhT_ref[...]

    def step(t, h_prev):
        row = t * bsz
        if bsz % 8 == 0:
            row = pl.multiple_of(row, 8)
        pre = xw_sc[pl.ds(row, bsz), :] + jnp.dot(
            h_prev, whhT, preferred_element_type=jnp.float32)
        h_new = jnp.tanh(pre)
        # Off the h-dependence chain; outputs emitted as one slab after the loop.
        hall_sc[pl.ds(row + bsz, bsz), :] = h_new
        return h_new

    h_sc[...] = lax.fori_loop(0, t_chunk, step, h_sc[...], unroll=True)

    # Hoisted, vectorized epilogue: one aligned slab store of the h_{t-1} rows
    # and one (tb, nhid) -> (tb, 1) squared-diff reduce for d_pos.
    h_prev_rows = hall_sc[pl.ds(0, tb), :]
    h_cur_rows = hall_sc[pl.ds(bsz, tb), :]
    hprev_ref[...] = h_prev_rows
    diff = h_cur_rows - h_prev_rows
    dpos_ref[...] = jnp.sum(diff * diff, axis=1, keepdims=True)


def rnn_forward(embf, h0, wihT, bsum, whhT, seq_len, bsz):
    """Returns (hprev, d_pos): hprev[n] = hidden state *before* step n//bsz,
    d_pos[n] = ||h_t - h_{t-1}||^2, both flattened to N = seq_len*bsz rows."""
    N, ninp = embf.shape
    nhid = whhT.shape[1]

    budget = _vmem_budget_bytes()
    fixed = 4 * (2 * (ninp * nhid + nhid * nhid + nhid + bsz * nhid)  # weights/h0
                 + 2 * bsz * nhid)                                    # h carry + hall tail
    per_step = 4 * bsz * (2 * ninp            # embf (double-buffered)
                          + 2 * (nhid + 1)    # hprev/dpos out (double-buffered)
                          + 2 * nhid)         # xw + hall scratch rows
    t_chunk = _pick_time_chunk(seq_len, bsz, fixed, per_step, budget, target=32)
    tb = t_chunk * bsz
    n_chunks = seq_len // t_chunk
    est = fixed + t_chunk * per_step

    flops = 2 * N * ninp * nhid + 2 * N * nhid * nhid + 4 * N * nhid
    bytes_accessed = 4 * (N * ninp + N * (nhid + 1) + ninp * nhid
                          + nhid * nhid + nhid + bsz * nhid)

    return pl.pallas_call(
        functools.partial(rnn_chunk_kernel, t_chunk, bsz),
        out_shape=(jax.ShapeDtypeStruct((N, nhid), jnp.float32),
                   jax.ShapeDtypeStruct((N, 1), jnp.float32)),
        grid_spec=pltpu.PrefetchScalarGridSpec(
            num_scalar_prefetch=0,
            grid=(n_chunks,),
            in_specs=[
                pl.BlockSpec((tb, ninp), lambda c: (c, 0)),
                pl.BlockSpec((bsz, nhid), lambda c: (0, 0)),
                pl.BlockSpec((ninp, nhid), lambda c: (0, 0)),
                pl.BlockSpec((1, nhid), lambda c: (0, 0)),
                pl.BlockSpec((nhid, nhid), lambda c: (0, 0)),
            ],
            out_specs=[
                pl.BlockSpec((tb, nhid), lambda c: (c, 0)),
                pl.BlockSpec((tb, 1), lambda c: (c, 0)),
            ],
            scratch_shapes=[
                pltpu.VMEM((bsz, nhid), jnp.float32),        # h carry
                pltpu.VMEM((tb, nhid), jnp.float32),         # chunk input projection
                pltpu.VMEM((tb + bsz, nhid), jnp.float32),   # h_{t-1}..h_t slab
            ],
        ),
        compiler_params=pltpu.CompilerParams(
            dimension_semantics=("arbitrary",),              # sequential recurrence
            vmem_limit_bytes=_vmem_limit_bytes(est)),
        cost_estimate=pl.CostEstimate(flops=int(flops),
                                      transcendentals=int(N * nhid),
                                      bytes_accessed=int(bytes_accessed)),
    )(embf, h0, wihT, bsum, whhT)


# ----------------------- Kernel 2: scores + NCE loss ----------------------- #

def score_loss_kernel(beta, nhid,
                      hprev_ref, side_ref, sproj_ref, whhT_ref, bhh_ref,
                      out_ref, m_sc, s_sc, x0_sc, hU_sc):
    s_idx = pl.program_id(1)
    nsamples = pl.num_programs(1)
    hprev = hprev_ref[...]                              # (TN, nhid)

    @pl.when(s_idx == 0)
    def _():
        side = side_ref[...]                            # (TN, 3): dpos | bpos | binary
        x0 = -(beta * side[:, 0:1] + side[:, 1:2])      # positive score
        x0_sc[...] = x0
        m_sc[...] = x0
        s_sc[...] = jnp.ones_like(x0)                   # exp(x0 - x0)
        # hiddens_times_U = linear(h_prev, W_hh, b_hh)
        hU_sc[...] = (jnp.dot(hprev, whhT_ref[...],
                              preferred_element_type=jnp.float32)
                      + bhh_ref[...])                   # (TN, nhid)

    # Per negative sample: tanh(proj[sample] + hU); proj already holds
    # emb @ W_ih^T + b_ih, and its last lane carries dec_bias[sample].
    sp = sproj_ref[0]                                   # (TN, nhid+1)
    out = jnp.tanh(sp[:, :nhid] + hU_sc[...])           # (TN, nhid)
    dn = hprev - out
    d_neg = jnp.sum(dn * dn, axis=1, keepdims=True)     # (TN, 1)
    xs = -(beta * d_neg + sp[:, nhid:nhid + 1])         # (TN, 1)

    # Online logsumexp over the (1 + nsamples) score columns.
    m_prev = m_sc[...]
    m_new = jnp.maximum(m_prev, xs)
    s_sc[...] = s_sc[...] * jnp.exp(m_prev - m_new) + jnp.exp(xs - m_new)
    m_sc[...] = m_new

    @pl.when(s_idx == nsamples - 1)
    def _():
        lse = m_sc[...] + jnp.log(s_sc[...])            # (TN, 1)
        neg_logp0 = lse - x0_sc[...]                    # -log_softmax[0]
        masked = neg_logp0 * side_ref[...][:, 2:3]
        out_ref[0] = jnp.sum(masked, axis=0, keepdims=True)   # per-tile partial


def score_loss(hprev, side, sproj, whhT, bhh, beta):
    N, nhid = hprev.shape
    nsamples = sproj.shape[0]

    budget = _vmem_budget_bytes()
    fixed = 4 * 2 * (nhid * nhid + nhid)                   # weights / bias
    per_row = 4 * (2 * nhid                                # hprev (2x buffered)
                   + 2 * 3                                 # packed side stream
                   + 2 * (nhid + 1)                        # streamed sproj tile
                   + nhid + 3)                             # hU + m/s/x0 scratch
    tn = _pick_row_tile(N, fixed, per_row, budget, target=512)
    n_row_tiles = N // tn
    est = fixed + tn * per_row

    flops = 2 * N * nhid * nhid + 10 * nsamples * N * nhid
    transcendentals = nsamples * N * nhid + 2 * nsamples * N + N
    bytes_accessed = 4 * (N * nhid + 3 * N + nsamples * N * (nhid + 1)
                          + nhid * nhid + nhid + n_row_tiles)

    return pl.pallas_call(
        functools.partial(score_loss_kernel, beta, nhid),
        out_shape=jax.ShapeDtypeStruct((n_row_tiles, 1, 1), jnp.float32),
        grid_spec=pltpu.PrefetchScalarGridSpec(
            num_scalar_prefetch=0,
            grid=(n_row_tiles, nsamples),
            in_specs=[
                pl.BlockSpec((tn, nhid), lambda r, s: (r, 0)),           # hprev
                pl.BlockSpec((tn, 3), lambda r, s: (r, 0)),              # dpos|bpos|binary
                # TODO(synk): sweep pipeline_mode=pl.Buffered(3) here if the
                # streamed sproj DMA is exposed (check v7x VMEM headroom first).
                pl.BlockSpec((1, tn, nhid + 1), lambda r, s: (s, r, 0)),  # proj[samples]|bias
                pl.BlockSpec((nhid, nhid), lambda r, s: (0, 0)),         # W_hh^T
                pl.BlockSpec((1, nhid), lambda r, s: (0, 0)),            # b_hh
            ],
            out_specs=pl.BlockSpec((1, 1, 1), lambda r, s: (r, 0, 0)),
            scratch_shapes=[pltpu.VMEM((tn, 1), jnp.float32),    # running max
                            pltpu.VMEM((tn, 1), jnp.float32),    # running sum
                            pltpu.VMEM((tn, 1), jnp.float32),    # x0
                            pltpu.VMEM((tn, nhid), jnp.float32)],  # hU
        ),
        compiler_params=pltpu.CompilerParams(
            dimension_semantics=("parallel", "arbitrary"),
            vmem_limit_bytes=_vmem_limit_bytes(est)),
        cost_estimate=pl.CostEstimate(flops=int(flops),
                                      transcendentals=int(transcendentals),
                                      bytes_accessed=int(bytes_accessed)),
    )(hprev, side, sproj, whhT, bhh)


# ------------------------------ glue wrapper ------------------------------- #

def rnn_model_loss(data, binary, hidden, samples, params, beta):
    """Equivalent of RNNModel.forward(data, binary, hidden) in eval mode."""
    emb_w = params["emb"]          # (ntoken, ninp)
    dec_bias = params["dec_bias"]  # (ntoken,)
    W_ih = params["W_ih"]          # (nhid, ninp)
    b_ih = params["b_ih"]          # (nhid,)
    W_hh = params["W_hh"]          # (nhid, nhid)
    b_hh = params["b_hh"]          # (nhid,)

    seq_len, bsz = data.shape
    nhid = W_hh.shape[0]
    N = seq_len * bsz

    # glue: embedding gathers, transposes, reshapes (XLA)
    wihT = W_ih.T                               # (ninp, nhid)
    whhT = W_hh.T                               # (nhid, nhid)
    bsum = (b_ih + b_hh).reshape(1, nhid)       # fused recurrence bias
    bhh2 = b_hh.reshape(1, nhid)

    embf = emb_w[data.reshape(N)]               # (N, ninp), time-major flatten
    h0 = hidden[0]                              # (bsz, nhid)

    # Kernel 1: recurrence; emits h_{t-1} rows and d_pos directly.
    hprev, dpos = rnn_forward(embf, h0, wihT, bsum, whhT, seq_len, bsz)

    # Packed (N, 3) side stream for the score kernel: d_pos | bias[data] | binary.
    bpos = dec_bias[data].reshape(N, 1)
    binary_flat = binary.reshape(N, 1).astype(jnp.float32)
    side = jnp.concatenate([dpos, bpos, binary_flat], axis=1)

    # Precomputed projection table: folds the per-sample input matmul + b_ih and
    # packs dec_bias into the last lane; only (nsamples, N, nhid+1) is streamed.
    # TODO(synk): an in-kernel DMA gather of proj rows from scalar-prefetched
    # sample ids would remove this remaining HBM materialization entirely.
    proj = emb_w @ W_ih.T + b_ih                                  # (ntoken, nhid)
    proj_aug = jnp.concatenate([proj, dec_bias[:, None]], axis=1) # (ntoken, nhid+1)
    sproj = proj_aug[samples]                                     # (nsamples, N, nhid+1)

    partials = score_loss(hprev, side, sproj, whhT, bhh2, float(beta))
    return jnp.sum(partials) / N


# ---------------------------- pure-JAX reference --------------------------- #

def reference_loss(data, binary, hidden, samples, params, beta):
    emb_w, dec_bias = params["emb"], params["dec_bias"]
    W_ih, b_ih, W_hh, b_hh = (params["W_ih"], params["b_ih"],
                              params["W_hh"], params["b_hh"])
    seq_len, bsz = data.shape
    nhid = W_hh.shape[0]
    nsamples = samples.shape[0]
    N = seq_len * bsz

    emb = emb_w[data]
    h = hidden[0]
    outs = []
    for t in range(seq_len):
        h = jnp.tanh(emb[t] @ W_ih.T + b_ih + h @ W_hh.T + b_hh)
        outs.append(h)
    raw = jnp.stack(outs, axis=0)
    h_all = jnp.concatenate([hidden, raw], axis=0)
    d_pos = jnp.sum((h_all[1:] - h_all[:-1]) ** 2, axis=2)
    d_pos = beta * d_pos + dec_bias[data]
    hprev = h_all[:-1].reshape(N, nhid)
    rows = [-d_pos.reshape(N)]
    hU = hprev @ W_hh.T + b_hh
    for i in range(nsamples):
        se = emb_w[samples[i]]
        out = jnp.tanh(se @ W_ih.T + b_ih + hU)
        d_neg = jnp.sum((hprev - out) ** 2, axis=1)
        rows.append(-(beta * d_neg + dec_bias[samples[i]]))
    x = jnp.stack(rows, axis=0)
    softmaxed = -jax.nn.log_softmax(x, axis=0)[0]
    return jnp.mean(softmaxed.reshape(seq_len, bsz) * binary)


# ---------------------------------- main ----------------------------------- #

if __name__ == "__main__":
    ntoken, ninp, nhid = 64, 32, 32
    seq_len, bsz, nsamples = 8, 2, 4
    beta = 1.0
    initrange = 0.1

    key = jax.random.PRNGKey(0)
    keys = jax.random.split(key, 10)
    params = {
        "emb": jax.random.uniform(keys[0], (ntoken, ninp), jnp.float32,
                                  -initrange, initrange),
        "dec_bias": jax.random.uniform(keys[1], (ntoken,), jnp.float32,
                                       -initrange, initrange),
        "W_ih": jax.random.uniform(keys[2], (nhid, ninp), jnp.float32,
                                   -initrange, initrange),
        "b_ih": jax.random.uniform(keys[3], (nhid,), jnp.float32,
                                   -initrange, initrange),
        "W_hh": jax.random.uniform(keys[4], (nhid, nhid), jnp.float32,
                                   -initrange, initrange),
        "b_hh": jax.random.uniform(keys[5], (nhid,), jnp.float32,
                                   -initrange, initrange),
    }

    data = jax.random.randint(keys[6], (seq_len, bsz), 0, ntoken, jnp.int32)
    binary = (jax.random.uniform(keys[7], (seq_len, bsz)) > 0.2).astype(jnp.float32)
    hidden = jnp.zeros((1, bsz, nhid), jnp.float32)
    # TODO(synk): NegativeSampler's multinomial draw has no Pallas equivalent;
    # negative sample ids are drawn deterministically here instead.
    samples = jax.random.randint(keys[8], (nsamples, seq_len * bsz), 0, ntoken,
                                 jnp.int32)

    loss = rnn_model_loss(data, binary, hidden, samples, params, beta)
    jax.block_until_ready(loss)

    ref = reference_loss(data, binary, hidden, samples, params, beta)
    assert jnp.allclose(loss, ref, rtol=1e-5, atol=1e-5), (loss, ref)

    print("KERNEL_OK")
</pallas_src>

<mosaic_0001>
module attributes {stable_mosaic.version = 11 : i64} {
  func.func @rnn_chunk_kernel(%arg0: i32, %arg1: memref<16x32xf32, #tpu.memory_space<vmem>>, %arg2: memref<2x32xf32, #tpu.memory_space<vmem>>, %arg3: memref<32x32xf32, #tpu.memory_space<vmem>>, %arg4: memref<1x32xf32, #tpu.memory_space<vmem>>, %arg5: memref<32x32xf32, #tpu.memory_space<vmem>>, %arg6: memref<16x32xf32, #tpu.memory_space<vmem>>, %arg7: memref<16x1xf32, #tpu.memory_space<vmem>>, %arg8: memref<2x32xf32, #tpu.memory_space<vmem>>, %arg9: memref<16x32xf32, #tpu.memory_space<vmem>>, %arg10: memref<18x32xf32, #tpu.memory_space<vmem>>) attributes {dimension_semantics = [#tpu.dimension_semantics<arbitrary>], iteration_bounds = array<i64: 1>, scalar_prefetch = 0 : i64, scratch_operands = 3 : i64, tpu.core_type = #tpu.core_type<tc>, window_params = [{transform_indices = @transform_0, window_bounds = array<i64: 16, 32>}, {pipeline_mode = #tpu.pipeline_mode<synchronous>, transform_indices = @transform_1, window_bounds = array<i64: 2, 32>}, {pipeline_mode = #tpu.pipeline_mode<synchronous>, transform_indices = @transform_2, window_bounds = array<i64: 32, 32>}, {pipeline_mode = #tpu.pipeline_mode<synchronous>, transform_indices = @transform_3, window_bounds = array<i64: 1, 32>}, {pipeline_mode = #tpu.pipeline_mode<synchronous>, transform_indices = @transform_4, window_bounds = array<i64: 32, 32>}, {transform_indices = @transform_5, window_bounds = array<i64: 16, 32>}, {transform_indices = @transform_6, window_bounds = array<i64: 16, 1>}]} {
    %c0_i32 = arith.constant 0 : i32
    %0 = arith.cmpi eq, %arg0, %c0_i32 : i32
    %1 = arith.extui %0 : i1 to i32
    %c0_i32_0 = arith.constant 0 : i32
    %2 = arith.cmpi ne, %1, %c0_i32_0 : i32
    scf.if %2 {
      %c0_67 = arith.constant 0 : index
      %c0_68 = arith.constant 0 : index
      %95 = vector.load %arg2[%c0_67, %c0_68] : memref<2x32xf32, #tpu.memory_space<vmem>>, vector<2x32xf32>
      %c0_69 = arith.constant 0 : index
      %c0_70 = arith.constant 0 : index
      %96 = vector.load %arg8[%c0_69, %c0_70] : memref<2x32xf32, #tpu.memory_space<vmem>>, vector<2x32xf32>
      tpu.vector_store %arg8[%c0_69, %c0_70], %95 {strides = array<i32>} : memref<2x32xf32, #tpu.memory_space<vmem>>, vector<2x32xf32>,
    } else {
    }
    %c0 = arith.constant 0 : index
    %c0_1 = arith.constant 0 : index
    %3 = vector.load %arg1[%c0, %c0_1] : memref<16x32xf32, #tpu.memory_space<vmem>>, vector<16x32xf32>
    %c0_2 = arith.constant 0 : index
    %c0_3 = arith.constant 0 : index
    %4 = vector.load %arg3[%c0_2, %c0_3] : memref<32x32xf32, #tpu.memory_space<vmem>>, vector<32x32xf32>
    %cst = arith.constant dense<0.000000e+00> : vector<16x32xf32>
    %5 = tpu.matmul %3, %4, %cst {dimension_numbers = #tpu.dot_dimension_numbers<[1], [0], [0], [1], [0, 0, 1, 1], [], []>} : vector<16x32xf32>, vector<32x32xf32>, vector<16x32xf32> -> vector<16x32xf32>
    %c0_4 = arith.constant 0 : index
    %c0_5 = arith.constant 0 : index
    %6 = vector.load %arg4[%c0_4, %c0_5] : memref<1x32xf32, #tpu.memory_space<vmem>>, vector<1x32xf32>
    %7 = vector.broadcast %6 : vector<1x32xf32> to vector<16x32xf32>
    %8 = arith.addf %5, %7 : vector<16x32xf32>
    %c0_6 = arith.constant 0 : index
    %c0_7 = arith.constant 0 : index
    %9 = vector.load %arg9[%c0_6, %c0_7] : memref<16x32xf32, #tpu.memory_space<vmem>>, vector<16x32xf32>
    tpu.vector_store %arg9[%c0_6, %c0_7], %8 {strides = array<i32>} : memref<16x32xf32, #tpu.memory_space<vmem>>, vector<16x32xf32>,
    %c0_8 = arith.constant 0 : index
    %c0_9 = arith.constant 0 : index
    %10 = vector.load %arg8[%c0_8, %c0_9] : memref<2x32xf32, #tpu.memory_space<vmem>>, vector<2x32xf32>
    %c0_10 = arith.constant 0 : index
    %c0_11 = arith.constant 0 : index
    %11 = vector.load %arg10[%c0_10, %c0_11] : memref<18x32xf32, #tpu.memory_space<vmem>>, vector<2x32xf32>
    tpu.vector_store %arg10[%c0_10, %c0_11], %10 {strides = array<i32>} : memref<18x32xf32, #tpu.memory_space<vmem>>, vector<2x32xf32>,
    %c0_12 = arith.constant 0 : index
    %c0_13 = arith.constant 0 : index
    %12 = vector.load %arg5[%c0_12, %c0_13] : memref<32x32xf32, #tpu.memory_space<vmem>>, vector<32x32xf32>
    %c0_14 = arith.constant 0 : index
    %c0_15 = arith.constant 0 : index
    %13 = vector.load %arg8[%c0_14, %c0_15] : memref<2x32xf32, #tpu.memory_space<vmem>>, vector<2x32xf32>
    %c0_i32_16 = arith.constant 0 : i32
    %c2_i32 = arith.constant 2 : i32
    %14 = arith.muli %c0_i32_16, %c2_i32 : i32
    %15 = arith.index_cast %14 : i32 to index
    %c0_17 = arith.constant 0 : index
    %16 = vector.load %arg9[%15, %c0_17] : memref<16x32xf32, #tpu.memory_space<vmem>>, vector<2x32xf32>
    %cst_18 = arith.constant dense<0.000000e+00> : vector<2x32xf32>
    %17 = tpu.matmul %13, %12, %cst_18 {dimension_numbers = #tpu.dot_dimension_numbers<[1], [0], [0], [1], [0, 0, 1, 1], [], []>} : vector<2x32xf32>, vector<32x32xf32>, vector<2x32xf32> -> vector<2x32xf32>
    %18 = arith.addf %16, %17 : vector<2x32xf32>
    %19 = math.tanh %18 : vector<2x32xf32>
    %c2_i32_19 = arith.constant 2 : i32
    %20 = arith.addi %14, %c2_i32_19 : i32
    %21 = arith.index_cast %20 : i32 to index
    %c0_20 = arith.constant 0 : index
    %22 = vector.load %arg10[%21, %c0_20] : memref<18x32xf32, #tpu.memory_space<vmem>>, vector<2x32xf32>
    tpu.vector_store %arg10[%21, %c0_20], %19 {strides = array<i32>} : memref<18x32xf32, #tpu.memory_space<vmem>>, vector<2x32xf32>,
    %c1_i32 = arith.constant 1 : i32
    %c2_i32_21 = arith.constant 2 : i32
    %23 = arith.muli %c1_i32, %c2_i32_21 : i32
    %24 = arith.index_cast %23 : i32 to index
    %c0_22 = arith.constant 0 : index
    %25 = vector.load %arg9[%24, %c0_22] : memref<16x32xf32, #tpu.memory_space<vmem>>, vector<2x32xf32>
    %cst_23 = arith.constant dense<0.000000e+00> : vector<2x32xf32>
    %26 = tpu.matmul %19, %12, %cst_23 {dimension_numbers = #tpu.dot_dimension_numbers<[1], [0], [0], [1], [0, 0, 1, 1], [], []>} : vector<2x32xf32>, vector<32x32xf32>, vector<2x32xf32> -> vector<2x32xf32>
    %27 = arith.addf %25, %26 : vector<2x32xf32>
    %28 = math.tanh %27 : vector<2x32xf32>
    %c2_i32_24 = arith.constant 2 : i32
    %29 = arith.addi %23, %c2_i32_24 : i32
    %30 = arith.index_cast %29 : i32 to index
    %c0_25 = arith.constant 0 : index
    %31 = vector.load %arg10[%30, %c0_25] : memref<18x32xf32, #tpu.memory_space<vmem>>, vector<2x32xf32>
    tpu.vector_store %arg10[%30, %c0_25], %28 {strides = array<i32>} : memref<18x32xf32, #tpu.memory_space<vmem>>, vector<2x32xf32>,
    %c2_i32_26 = arith.constant 2 : i32
    %c2_i32_27 = arith.constant 2 : i32
    %32 = arith.muli %c2_i32_26, %c2_i32_27 : i32
    %33 = arith.index_cast %32 : i32 to index
    %c0_28 = arith.constant 0 : index
    %34 = vector.load %arg9[%33, %c0_28] : memref<16x32xf32, #tpu.memory_space<vmem>>, vector<2x32xf32>
    %cst_29 = arith.constant dense<0.000000e+00> : vector<2x32xf32>
    %35 = tpu.matmul %28, %12, %cst_29 {dimension_numbers = #tpu.dot_dimension_numbers<[1], [0], [0], [1], [0, 0, 1, 1], [], []>} : vector<2x32xf32>, vector<32x32xf32>, vector<2x32xf32> -> vector<2x32xf32>
    %36 = arith.addf %34, %35 : vector<2x32xf32>
    %37 = math.tanh %36 : vector<2x32xf32>
    %c2_i32_30 = arith.constant 2 : i32
    %38 = arith.addi %32, %c2_i32_30 : i32
    %39 = arith.index_cast %38 : i32 to index
    %c0_31 = arith.constant 0 : index
    %40 = vector.load %arg10[%39, %c0_31] : memref<18x32xf32, #tpu.memory_space<vmem>>, vector<2x32xf32>
    tpu.vector_store %arg10[%39, %c0_31], %37 {strides = array<i32>} : memref<18x32xf32, #tpu.memory_space<vmem>>, vector<2x32xf32>,
    %c3_i32 = arith.constant 3 : i32
    %c2_i32_32 = arith.constant 2 : i32
    %41 = arith.muli %c3_i32, %c2_i32_32 : i32
    %42 = arith.index_cast %41 : i32 to index
    %c0_33 = arith.constant 0 : index
    %43 = vector.load %arg9[%42, %c0_33] : memref<16x32xf32, #tpu.memory_space<vmem>>, vector<2x32xf32>
    %cst_34 = arith.constant dense<0.000000e+00> : vector<2x32xf32>
    %44 = tpu.matmul %37, %12, %cst_34 {dimension_numbers = #tpu.dot_dimension_numbers<[1], [0], [0], [1], [0, 0, 1, 1], [], []>} : vector<2x32xf32>, vector<32x32xf32>, vector<2x32xf32> -> vector<2x32xf32>
    %45 = arith.addf %43, %44 : vector<2x32xf32>
    %46 = math.tanh %45 : vector<2x32xf32>
    %c2_i32_35 = arith.constant 2 : i32
    %47 = arith.addi %41, %c2_i32_35 : i32
    %48 = arith.index_cast %47 : i32 to index
    %c0_36 = arith.constant 0 : index
    %49 = vector.load %arg10[%48, %c0_36] : memref<18x32xf32, #tpu.memory_space<vmem>>, vector<2x32xf32>
    tpu.vector_store %arg10[%48, %c0_36], %46 {strides = array<i32>} : memref<18x32xf32, #tpu.memory_space<vmem>>, vector<2x32xf32>,
    %c4_i32 = arith.constant 4 : i32
    %c2_i32_37 = arith.constant 2 : i32
    %50 = arith.muli %c4_i32, %c2_i32_37 : i32
    %51 = arith.index_cast %50 : i32 to index
    %c0_38 = arith.constant 0 : index
    %52 = vector.load %arg9[%51, %c0_38] : memref<16x32xf32, #tpu.memory_space<vmem>>, vector<2x32xf32>
    %cst_39 = arith.constant dense<0.000000e+00> : vector<2x32xf32>
    %53 = tpu.matmul %46, %12, %cst_39 {dimension_numbers = #tpu.dot_dimension_numbers<[1], [0], [0], [1], [0, 0, 1, 1], [], []>} : vector<2x32xf32>, vector<32x32xf32>, vector<2x32xf32> -> vector<2x32xf32>
    %54 = arith.addf %52, %53 : vector<2x32xf32>
    %55 = math.tanh %54 : vector<2x32xf32>
    %c2_i32_40 = arith.constant 2 : i32
    %56 = arith.addi %50, %c2_i32_40 : i32
    %57 = arith.index_cast %56 : i32 to index
    %c0_41 = arith.constant 0 : index
    %58 = vector.load %arg10[%57, %c0_41] : memref<18x32xf32, #tpu.memory_space<vmem>>, vector<2x32xf32>
    tpu.vector_store %arg10[%57, %c0_41], %55 {strides = array<i32>} : memref<18x32xf32, #tpu.memory_space<vmem>>, vector<2x32xf32>,
    %c5_i32 = arith.constant 5 : i32
    %c2_i32_42 = arith.constant 2 : i32
    %59 = arith.muli %c5_i32, %c2_i32_42 : i32
    %60 = arith.index_cast %59 : i32 to index
    %c0_43 = arith.constant 0 : index
    %61 = vector.load %arg9[%60, %c0_43] : memref<16x32xf32, #tpu.memory_space<vmem>>, vector<2x32xf32>
    %cst_44 = arith.constant dense<0.000000e+00> : vector<2x32xf32>
    %62 = tpu.matmul %55, %12, %cst_44 {dimension_numbers = #tpu.dot_dimension_numbers<[1], [0], [0], [1], [0, 0, 1, 1], [], []>} : vector<2x32xf32>, vector<32x32xf32>, vector<2x32xf32> -> vector<2x32xf32>
    %63 = arith.addf %61, %62 : vector<2x32xf32>
    %64 = math.tanh %63 : vector<2x32xf32>
    %c2_i32_45 = arith.constant 2 : i32
    %65 = arith.addi %59, %c2_i32_45 : i32
    %66 = arith.index_cast %65 : i32 to index
    %c0_46 = arith.constant 0 : index
    %67 = vector.load %arg10[%66, %c0_46] : memref<18x32xf32, #tpu.memory_space<vmem>>, vector<2x32xf32>
    tpu.vector_store %arg10[%66, %c0_46], %64 {strides = array<i32>} : memref<18x32xf32, #tpu.memory_space<vmem>>, vector<2x32xf32>,
    %c6_i32 = arith.constant 6 : i32
    %c2_i32_47 = arith.constant 2 : i32
    %68 = arith.muli %c6_i32, %c2_i32_47 : i32
    %69 = arith.index_cast %68 : i32 to index
    %c0_48 = arith.constant 0 : index
    %70 = vector.load %arg9[%69, %c0_48] : memref<16x32xf32, #tpu.memory_space<vmem>>, vector<2x32xf32>
    %cst_49 = arith.constant dense<0.000000e+00> : vector<2x32xf32>
    %71 = tpu.matmul %64, %12, %cst_49 {dimension_numbers = #tpu.dot_dimension_numbers<[1], [0], [0], [1], [0, 0, 1, 1], [], []>} : vector<2x32xf32>, vector<32x32xf32>, vector<2x32xf32> -> vector<2x32xf32>
    %72 = arith.addf %70, %71 : vector<2x32xf32>
    %73 = math.tanh %72 : vector<2x32xf32>
    %c2_i32_50 = arith.constant 2 : i32
    %74 = arith.addi %68, %c2_i32_50 : i32
    %75 = arith.index_cast %74 : i32 to index
    %c0_51 = arith.constant 0 : index
    %76 = vector.load %arg10[%75, %c0_51] : memref<18x32xf32, #tpu.memory_space<vmem>>, vector<2x32xf32>
    tpu.vector_store %arg10[%75, %c0_51], %73 {strides = array<i32>} : memref<18x32xf32, #tpu.memory_space<vmem>>, vector<2x32xf32>,
    %c7_i32 = arith.constant 7 : i32
    %c2_i32_52 = arith.constant 2 : i32
    %77 = arith.muli %c7_i32, %c2_i32_52 : i32
    %78 = arith.index_cast %77 : i32 to index
    %c0_53 = arith.constant 0 : index
    %79 = vector.load %arg9[%78, %c0_53] : memref<16x32xf32, #tpu.memory_space<vmem>>, vector<2x32xf32>
    %cst_54 = arith.constant dense<0.000000e+00> : vector<2x32xf32>
    %80 = tpu.matmul %73, %12, %cst_54 {dimension_numbers = #tpu.dot_dimension_numbers<[1], [0], [0], [1], [0, 0, 1, 1], [], []>} : vector<2x32xf32>, vector<32x32xf32>, vector<2x32xf32> -> vector<2x32xf32>
    %81 = arith.addf %79, %80 : vector<2x32xf32>
    %82 = math.tanh %81 : vector<2x32xf32>
    %c2_i32_55 = arith.constant 2 : i32
    %83 = arith.addi %77, %c2_i32_55 : i32
    %84 = arith.index_cast %83 : i32 to index
    %c0_56 = arith.constant 0 : index
    %85 = vector.load %arg10[%84, %c0_56] : memref<18x32xf32, #tpu.memory_space<vmem>>, vector<2x32xf32>
    tpu.vector_store %arg10[%84, %c0_56], %82 {strides = array<i32>} : memref<18x32xf32, #tpu.memory_space<vmem>>, vector<2x32xf32>,
    %c8_i32 = arith.constant 8 : i32
    %c0_57 = arith.constant 0 : index
    %c0_58 = arith.constant 0 : index
    %86 = vector.load %arg8[%c0_57, %c0_58] : memref<2x32xf32, #tpu.memory_space<vmem>>, vector<2x32xf32>
    tpu.vector_store %arg8[%c0_57, %c0_58], %82 {strides = array<i32>} : memref<2x32xf32, #tpu.memory_space<vmem>>, vector<2x32xf32>,
    %c0_59 = arith.constant 0 : index
    %c0_60 = arith.constant 0 : index
    %87 = vector.load %arg10[%c0_59, %c0_60] : memref<18x32xf32, #tpu.memory_space<vmem>>, vector<16x32xf32>
    %c2 = arith.constant 2 : index
    %c0_61 = arith.constant 0 : index
    %88 = vector.load %arg10[%c2, %c0_61] : memref<18x32xf32, #tpu.memory_space<vmem>>, vector<16x32xf32>
    %c0_62 = arith.constant 0 : index
    %c0_63 = arith.constant 0 : index
    %89 = vector.load %arg6[%c0_62, %c0_63] : memref<16x32xf32, #tpu.memory_space<vmem>>, vector<16x32xf32>
    tpu.vector_store %arg6[%c0_62, %c0_63], %87 {strides = array<i32>} : memref<16x32xf32, #tpu.memory_space<vmem>>, vector<16x32xf32>,
    %90 = arith.subf %88, %87 : vector<16x32xf32>
    %91 = arith.mulf %90, %90 : vector<16x32xf32>
    %cst_64 = arith.constant dense<0.000000e+00> : vector<16xf32>
    %92 = vector.multi_reduction <add>, %91, %cst_64 [1] : vector<16x32xf32> to vector<16xf32>
    %93 = vector.shape_cast %92 : vector<16xf32> to vector<16x1xf32>
    %c0_65 = arith.constant 0 : index
    %c0_66 = arith.constant 0 : index
    %94 = vector.load %arg7[%c0_65, %c0_66] : memref<16x1xf32, #tpu.memory_space<vmem>>, vector<16x1xf32>
    tpu.vector_store %arg7[%c0_65, %c0_66], %93 {strides = array<i32>} : memref<16x1xf32, #tpu.memory_space<vmem>>, vector<16x1xf32>,
    return
  }
  func.func @transform_0(%arg0: i32) -> (i32, i32) {
    %c0_i32 = arith.constant 0 : i32
    %c0_i32_0 = arith.constant 0 : i32
    return %arg0, %c0_i32 : i32, i32
  }
  func.func @transform_1(%arg0: i32) -> (i32, i32) {
    %c0_i32 = arith.constant 0 : i32
    %c0_i32_0 = arith.constant 0 : i32
    %c0_i32_1 = arith.constant 0 : i32
    return %c0_i32, %c0_i32_0 : i32, i32
  }
  func.func @transform_2(%arg0: i32) -> (i32, i32) {
    %c0_i32 = arith.constant 0 : i32
    %c0_i32_0 = arith.constant 0 : i32
    %c0_i32_1 = arith.constant 0 : i32
    return %c0_i32, %c0_i32_0 : i32, i32
  }
  func.func @transform_3(%arg0: i32) -> (i32, i32) {
    %c0_i32 = arith.constant 0 : i32
    %c0_i32_0 = arith.constant 0 : i32
    %c0_i32_1 = arith.constant 0 : i32
    return %c0_i32, %c0_i32_0 : i32, i32
  }
  func.func @transform_4(%arg0: i32) -> (i32, i32) {
    %c0_i32 = arith.constant 0 : i32
    %c0_i32_0 = arith.constant 0 : i32
    %c0_i32_1 = arith.constant 0 : i32
    return %c0_i32, %c0_i32_0 : i32, i32
  }
  func.func @transform_5(%arg0: i32) -> (i32, i32) {
    %c0_i32 = arith.constant 0 : i32
    %c0_i32_0 = arith.constant 0 : i32
    return %arg0, %c0_i32 : i32, i32
  }
  func.func @transform_6(%arg0: i32) -> (i32, i32) {
    %c0_i32 = arith.constant 0 : i32
    %c0_i32_0 = arith.constant 0 : i32
    return %arg0, %c0_i32 : i32, i32
  }
}

</mosaic_0001>

<llo_original>
// kernel: tpu_custom_call.1
$region0: #{tpu_custom_call.1}
  #allocation0 [shape = 'u32[]', space=smem, size = 0x4, offset = 0x4, fixed_abs, tag = 'smem constant byte address 0x4 - core index']
  #allocation1 [shape = 'u32[144,128]{1,0:T(1,128)}', space=vmem, size = 0x12000, scoped, tag = 'internal scratch']
  #allocation2 [shape = 'f32[2,32]{1,0:T(2,128)}', space=vmem, size = 0x400, scoped, tag = 'scratch operand']
  #allocation3 [shape = 'f32[16,32]{1,0:T(8,128)}', space=vmem, size = 0x2000, scoped, tag = 'scratch operand']
  #allocation4 [shape = 'f32[18,32]{1,0:T(8,128)}', space=vmem, size = 0x3000, scoped, tag = 'scratch operand']
  %s0 = inlined_call_operand.hbm [shape: f32[16,32], index: 0, kind: input, shape index: {}]
  %s1 = inlined_call_operand.hbm [shape: f32[2,32], index: 1, kind: input, shape index: {}]
  %s2 = inlined_call_operand.hbm [shape: f32[32,32], index: 2, kind: input, shape index: {}]
  %s3 = inlined_call_operand.vmem [shape: f32[1,32], index: 3, kind: input, shape index: {}]
  %s4 = inlined_call_operand.hbm [shape: f32[32,32], index: 4, kind: input, shape index: {}]
  %s5 = inlined_call_operand.hbm [shape: f32[16,32], index: 5, kind: output, shape index: {0}]
  %s6 = inlined_call_operand.vmem [shape: f32[16,1], index: 6, kind: output, shape index: {1}]
  %7 = xla_tuple %s5, %s6
  %s8 = sld [smem:[#allocation0]]
  $region58: #{tpu_custom_call.1} parent=0
    _
  %s10 = ssub.s32 1, %s8
  %s11 = scalar_select 0, %s10, %s8
  $region1: #{tpu_custom_call.1} parent=0
    #allocation5 [shape = 'u8[8192]{0}', space=vmem, size = 0x2000, scoped, tag = 'input window, operand 0, single buffered']
    #allocation6 [shape = 's32[1]{0}', space=sflag, size = 0x4, scoped, tag = 'scoped memory for tpu_custom_call.1']
    #allocation7 [shape = 's32[1]{0}', space=sflag, size = 0x4, scoped, tag = 'scoped memory for tpu_custom_call.1']
    #allocation8 [shape = 'u8[1024]{0}', space=vmem, size = 0x400, scoped, tag = 'input window, operand 1, single buffered']
    #allocation9 [shape = 's32[1]{0}', space=sflag, size = 0x4, scoped, tag = 'scoped memory for tpu_custom_call.1']
    #allocation10 [shape = 'u8[16384]{0}', space=vmem, size = 0x4000, scoped, tag = 'input window, operand 2, single buffered']
    #allocation11 [shape = 'u8[16384]{0}', space=vmem, size = 0x4000, scoped, tag = 'input window, operand 4, single buffered']
    #allocation12 [shape = 's32[1]{0}', space=sflag, size = 0x4, scoped, tag = 'scoped memory for tpu_custom_call.1']
    #allocation13 [shape = 'u8[8192]{0}', space=vmem, size = 0x2000, scoped, tag = 'output window, operand 0, single buffered']
    %12 = vsyncpa [#allocation6], 0
    %13 = vsyncpa [#allocation9], 0
    %14 = vsyncpa [#allocation12], 0
    %15 = vsyncpa [#allocation7], 0
    // Predicated region
    $region2: #{tpu_custom_call.1} parent=1 // pred_check
      _
    $region3: #{tpu_custom_call.1} parent=1 // pred_check_branch
      %17 = sbr.rel (0) target = $region5
    $region4: #{tpu_custom_call.1} parent=1 // pred_region
      %s19 = ssub.s32 256, 256
      %20 = vsyncadd [#allocation6], %s19
      %s21 = sshll.u32 [#allocation5], 4
      %s22 = int_to_ptr.vmem [resolvable:$true] %s21
      %27 = dma.hbm_to_vmem [thread:$0]  %s0, 256, %s22, [#allocation6], 128, 128, 8
    $region5: #{tpu_custom_call.1} parent=1 // pred_fallthru
      _
    // Predicated region
    $region6: #{tpu_custom_call.1} parent=1 // pred_check
      _
    $region7: #{tpu_custom_call.1} parent=1 // pred_check_branch
      %29 = sbr.rel (0) target = $region9
    $region8: #{tpu_custom_call.1} parent=1 // pred_region
      %s31 = ssub.s32 32, 32
      %32 = vsyncadd [#allocation9], %s31
      %s34 = sshll.u32 [#allocation8], 4
      %s35 = int_to_ptr.vmem [resolvable:$true] %s34
      %37 = dma.hbm_to_vmem [thread:$0]  %s1, 32, %s35, [#allocation9]
    $region9: #{tpu_custom_call.1} parent=1 // pred_fallthru
      _
    // Predicated region
    $region10: #{tpu_custom_call.1} parent=1 // pred_check
      _
    $region11: #{tpu_custom_call.1} parent=1 // pred_check_branch
      %39 = sbr.rel (0) target = $region13
    $region12: #{tpu_custom_call.1} parent=1 // pred_region
      %s41 = ssub.s32 512, 512
      %42 = vsyncadd [#allocation9], %s41
      %s43 = sshll.u32 [#allocation10], 4
      %s44 = int_to_ptr.vmem [resolvable:$true] %s43
      %49 = dma.hbm_to_vmem [thread:$0]  %s2, 512, %s44, [#allocation9], 128, 128, 8
    $region13: #{tpu_custom_call.1} parent=1 // pred_fallthru
      _
    // Predicated region
    $region14: #{tpu_custom_call.1} parent=1 // pred_check
      _
    $region15: #{tpu_custom_call.1} parent=1 // pred_check_branch
      %51 = sbr.rel (0) target = $region17
    $region16: #{tpu_custom_call.1} parent=1 // pred_region
      _
    $region17: #{tpu_custom_call.1} parent=1 // pred_fallthru
      _
    // Predicated region
    $region18: #{tpu_custom_call.1} parent=1 // pred_check
      _
    $region19: #{tpu_custom_call.1} parent=1 // pred_check_branch
      %53 = sbr.rel (0) target = $region21
    $region20: #{tpu_custom_call.1} parent=1 // pred_region
      %s55 = ssub.s32 512, 512
      %56 = vsyncadd [#allocation12], %s55
      %s57 = sshll.u32 [#allocation11], 4
      %s58 = int_to_ptr.vmem [resolvable:$true] %s57
      %63 = dma.hbm_to_vmem [thread:$0]  %s4, 512, %s58, [#allocation12], 128, 128, 8
    $region21: #{tpu_custom_call.1} parent=1 // pred_fallthru
      _
    // Predicated region
    $region22: #{tpu_custom_call.1} parent=1 // pred_check
      _
    $region23: #{tpu_custom_call.1} parent=1 // pred_check_branch
      %65 = sbr.rel (0) target = $region25
    $region24: #{tpu_custom_call.1} parent=1 // pred_region
      %66 = dma.done [#allocation6], 256
    $region25: #{tpu_custom_call.1} parent=1 // pred_fallthru
      _
    // Predicated region
    $region26: #{tpu_custom_call.1} parent=1 // pred_check
      _
    $region27: #{tpu_custom_call.1} parent=1 // pred_check_branch
      %68 = sbr.rel (0) target = $region29
    $region28: #{tpu_custom_call.1} parent=1 // pred_region
      %69 = dma.done [#allocation9], 32
    $region29: #{tpu_custom_call.1} parent=1 // pred_fallthru
      _
    // Predicated region
    $region30: #{tpu_custom_call.1} parent=1 // pred_check
      _
    $region31: #{tpu_custom_call.1} parent=1 // pred_check_branch
      %71 = sbr.rel (0) target = $region33
    $region32: #{tpu_custom_call.1} parent=1 // pred_region
      %72 = dma.done [#allocation9], 512
    $region33: #{tpu_custom_call.1} parent=1 // pred_fallthru
      _
    // Predicated region
    $region34: #{tpu_custom_call.1} parent=1 // pred_check
      _
    $region35: #{tpu_custom_call.1} parent=1 // pred_check_branch
      %74 = sbr.rel (0) target = $region37
    $region36: #{tpu_custom_call.1} parent=1 // pred_region
      %75 = dma.done [#allocation12], 512
    $region37: #{tpu_custom_call.1} parent=1 // pred_fallthru
      _
    %p76 = scmp.eq.s32.totalorder 0, 0
    // Predicated region
    $region38: #{tpu_custom_call.1} parent=1 // pred_check
      %p77 = pneg %p76
    $region39: #{tpu_custom_call.1} parent=1 // pred_check_branch
      %79 = sbr.rel (%p77) target = $region41
    $region40: #{tpu_custom_call.1} parent=1 // pred_region
      %v80 = vld [vmem:[#allocation8] sm:$0x3]
      %vm81 = vcmask 254976
      %82 = vst.msk [vmem:[#allocation2] sm:$0x3] %vm81, %v80
    $region41: #{tpu_custom_call.1} parent=1 // pred_fallthru
      _
    %v83 = vld [vmem:[#allocation5] sm:$0xff]
    %v84 = vld [vmem:[#allocation5 + $0x8] sm:$0xff]
    %v85 = vld [vmem:[#allocation10] sm:$0xff]
    %v86 = vld [vmem:[#allocation10 + $0x8] sm:$0xff]
    %v87 = vld [vmem:[#allocation10 + $0x10] sm:$0xff]
    %v88 = vld [vmem:[#allocation10 + $0x18] sm:$0xff]
    %v89 = vld [vmem:[%s3] sm:$0x1]
    %v91 = vlaneseq
    %v92 = vshrl.u32 %v91, 7
    %v93 = vsub.s32 0, %v92
    %v94 = vrot.slane %v89, %v93
    %vm96 = vcmask 261120
    %v98 = vsel %vm96, %v83, 0
    %v101 = vsel %vm96, %v84, 0
    %103 = vmatprep.subr.mxu0 0.0
    %104 = vmatpush1.msra.mxu0 0.0
    %105 = vmatprep.subr.mxu0 0.0
    %106 = vmatpush1.msra.mxu0 0.0
    %107 = vmatprep.subr.mxu0 0.0
    %108 = vmatpush1.msra.mxu0 0.0
    %109 = vmatprep.subr.mxu0 0.0
    %110 = vmatpush1.msra.mxu0 0.0
    %111 = vmatprep.subr.mxu0 0.0
    %112 = vmatpush1.msra.mxu0 0.0
    %113 = vmatprep.subr.mxu0 0.0
    %114 = vmatpush1.msra.mxu0 0.0
    %115 = vmatprep.subr.mxu0 0.0
    %116 = vmatpush1.msra.mxu0 0.0
    %117 = vmatprep.subr.mxu0 0.0
    %118 = vmatpush1.msra.mxu0 0.0
    %119 = vmatprep.subr.mxu0 0.0
    %120 = vmatpush1.msra.mxu0 0.0
    %121 = vmatprep.subr.mxu0 0.0
    %122 = vmatpush1.msra.mxu0 0.0
    %123 = vmatprep.subr.mxu0 0.0
    %124 = vmatpush1.msra.mxu0 0.0
    %125 = vmatprep.subr.mxu0 0.0
    %126 = vmatpush1.msra.mxu0 0.0
    %127 = vmatprep.subr.mxu0 0.0
    %128 = vmatpush1.msra.mxu0 %v88
    %129 = vmatprep.subr.mxu0 0.0
    %130 = vmatpush1.msra.mxu0 %v87
    %131 = vmatprep.subr.mxu0 0.0
    %132 = vmatpush1.msra.mxu0 %v86
    %133 = vmatprep.subr.mxu0 0.0
    %134 = vmatpush1.msra.mxu0 %v85
    %135 = vmatprep.subr.mxu0 0.0
    %136 = vmatpush2.msra.mxu0 0.0
    %137 = vmatprep.subr.mxu0 0.0
    %138 = vmatpush2.msra.mxu0 0.0
    %139 = vmatprep.subr.mxu0 0.0
    %140 = vmatpush2.msra.mxu0 0.0
    %141 = vmatprep.subr.mxu0 0.0
    %142 = vmatpush2.msra.mxu0 0.0
    %143 = vmatprep.subr.mxu0 0.0
    %144 = vmatpush2.msra.mxu0 0.0
    %145 = vmatprep.subr.mxu0 0.0
    %146 = vmatpush2.msra.mxu0 0.0
    %147 = vmatprep.subr.mxu0 0.0
    %148 = vmatpush2.msra.mxu0 0.0
    %149 = vmatprep.subr.mxu0 0.0
    %150 = vmatpush2.msra.mxu0 0.0
    %151 = vmatprep.subr.mxu0 0.0
    %152 = vmatpush2.msra.mxu0 0.0
    %153 = vmatprep.subr.mxu0 0.0
    %154 = vmatpush2.msra.mxu0 0.0
    %155 = vmatprep.subr.mxu0 0.0
    %156 = vmatpush2.msra.mxu0 0.0
    %157 = vmatprep.subr.mxu0 0.0
    %158 = vmatpush2.msra.mxu0 0.0
    %159 = vmatprep.subr.mxu0 0.0
    %160 = vmatpush2.msra.mxu0 0.0
    %161 = vmatprep.subr.mxu0 0.0
    %162 = vmatpush2.msra.mxu0 0.0
    %163 = vmatprep.subr.mxu0 0.0
    %164 = vmatpush2.msra.mxu0 0.0
    %165 = vmatprep.subr.mxu0 0.0
    %166 = vmatpush2.msra.mxu0 0.0
    %167 = vmatprep.mubr.f32.mxu0 0.0
    %168 = vmatmul.mubr.f32.gmra.mxu0 %v98
    %v169 = vpop.f32.mrf.mxu0
    %v170 = vadd.f32 %v94, %v169
    %v171 = vpop.f32.mrf.mxu0
    %172 = vmatprep.mubr.f32.mxu0 0.0
    %173 = vmatmul.mubr.f32.gmra.mxu0 %v101
    %v174 = vpop.f32.mrf.mxu0
    %v175 = vadd.f32 %v94, %v174
    %v176 = vpop.f32.mrf.mxu0
    %177 = vdwg.mxu0
    %178 = vst.msk [vmem:[#allocation3] sm:$0xff] %vm96, %v170
    %179 = vst.msk [vmem:[#allocation3 + $0x8] sm:$0xff] %vm96, %v175
    %v180 = vld [vmem:[#allocation2] sm:$0x3]
    %vm181 = vcmask 254976
    %182 = vst.msk [vmem:[#allocation4] sm:$0x3] %vm181, %v180
    %v183 = vld [vmem:[#allocation11] sm:$0xff]
    %v184 = vld [vmem:[#allocation11 + $0x8] sm:$0xff]
    %v185 = vld [vmem:[#allocation11 + $0x10] sm:$0xff]
    %v186 = vld [vmem:[#allocation11 + $0x18] sm:$0xff]
    %v187 = vld [vmem:[#allocation2] sm:$0x3]
    %v188 = vld [vmem:[#allocation3] sm:$0x3]
    %v190 = vsel %vm96, %v187, 0
    %192 = vmatprep.subr.mxu0 0.0
    %193 = vmatpush1.msra.mxu0 0.0
    %194 = vmatprep.subr.mxu0 0.0
    %195 = vmatpush1.msra.mxu0 0.0
    %196 = vmatprep.subr.mxu0 0.0
    %197 = vmatpush1.msra.mxu0 0.0
    %198 = vmatprep.subr.mxu0 0.0
    %199 = vmatpush1.msra.mxu0 0.0
    %200 = vmatprep.subr.mxu0 0.0
    %201 = vmatpush1.msra.mxu0 0.0
    %202 = vmatprep.subr.mxu0 0.0
    %203 = vmatpush1.msra.mxu0 0.0
    %204 = vmatprep.subr.mxu0 0.0
    %205 = vmatpush1.msra.mxu0 0.0
    %206 = vmatprep.subr.mxu0 0.0
    %207 = vmatpush1.msra.mxu0 0.0
    %208 = vmatprep.subr.mxu0 0.0
    %209 = vmatpush1.msra.mxu0 0.0
    %210 = vmatprep.subr.mxu0 0.0
    %211 = vmatpush1.msra.mxu0 0.0
    %212 = vmatprep.subr.mxu0 0.0
    %213 = vmatpush1.msra.mxu0 0.0
    %214 = vmatprep.subr.mxu0 0.0
    %215 = vmatpush1.msra.mxu0 0.0
    %216 = vmatprep.subr.mxu0 0.0
    %217 = vmatpush1.msra.mxu0 %v186
    %218 = vmatprep.subr.mxu0 0.0
    %219 = vmatpush1.msra.mxu0 %v185
    %220 = vmatprep.subr.mxu0 0.0
    %221 = vmatpush1.msra.mxu0 %v184
    %222 = vmatprep.subr.mxu0 0.0
    %223 = vmatpush1.msra.mxu0 %v183
    %224 = vmatprep.subr.mxu0 0.0
    %225 = vmatpush2.msra.mxu0 0.0
    %226 = vmatprep.subr.mxu0 0.0
    %227 = vmatpush2.msra.mxu0 0.0
    %228 = vmatprep.subr.mxu0 0.0
    %229 = vmatpush2.msra.mxu0 0.0
    %230 = vmatprep.subr.mxu0 0.0
    %231 = vmatpush2.msra.mxu0 0.0
    %232 = vmatprep.subr.mxu0 0.0
    %233 = vmatpush2.msra.mxu0 0.0
    %234 = vmatprep.subr.mxu0 0.0
    %235 = vmatpush2.msra.mxu0 0.0
    %236 = vmatprep.subr.mxu0 0.0
    %237 = vmatpush2.msra.mxu0 0.0
    %238 = vmatprep.subr.mxu0 0.0
    %239 = vmatpush2.msra.mxu0 0.0
    %240 = vmatprep.subr.mxu0 0.0
    %241 = vmatpush2.msra.mxu0 0.0
    %242 = vmatprep.subr.mxu0 0.0
    %243 = vmatpush2.msra.mxu0 0.0
    %244 = vmatprep.subr.mxu0 0.0
    %245 = vmatpush2.msra.mxu0 0.0
    %246 = vmatprep.subr.mxu0 0.0
    %247 = vmatpush2.msra.mxu0 0.0
    %248 = vmatprep.subr.mxu0 0.0
    %249 = vmatpush2.msra.mxu0 0.0
    %250 = vmatprep.subr.mxu0 0.0
    %251 = vmatpush2.msra.mxu0 0.0
    %252 = vmatprep.subr.mxu0 0.0
    %253 = vmatpush2.msra.mxu0 0.0
    %254 = vmatprep.subr.mxu0 0.0
    %255 = vmatpush2.msra.mxu0 0.0
    %256 = vmatprep.mubr.f32.mxu0 0.0
    %257 = vmatmul.mubr.f32.gmra.mxu0 %v190
    %v258 = vpop.f32.mrf.mxu0
    %v259 = vadd.f32 0.0, %v258
    %v260 = vpop.f32.mrf.mxu0
    %261 = vdwg.mxu0
    %v262 = vadd.f32 %v188, %v259
    %v263 = vtanh.pop %v262
    %264 = vst.msk [vmem:[#allocation4 + $0x2] sm:$0x3] %vm181, %v263
    %v265 = vld [vmem:[#allocation3 + $0x2] sm:$0x3]
    %v267 = vsel %vm96, %v263, 0
    %269 = vmatprep.subr.mxu0 0.0
    %270 = vmatpush1.msra.mxu0 0.0
    %271 = vmatprep.subr.mxu0 0.0
    %272 = vmatpush1.msra.mxu0 0.0
    %273 = vmatprep.subr.mxu0 0.0
    %274 = vmatpush1.msra.mxu0 0.0
    %275 = vmatprep.subr.mxu0 0.0
    %276 = vmatpush1.msra.mxu0 0.0
    %277 = vmatprep.subr.mxu0 0.0
    %278 = vmatpush1.msra.mxu0 0.0
    %279 = vmatprep.subr.mxu0 0.0
    %280 = vmatpush1.msra.mxu0 0.0
    %281 = vmatprep.subr.mxu0 0.0
    %282 = vmatpush1.msra.mxu0 0.0
    %283 = vmatprep.subr.mxu0 0.0
    %284 = vmatpush1.msra.mxu0 0.0
    %285 = vmatprep.subr.mxu0 0.0
    %286 = vmatpush1.msra.mxu0 0.0
    %287 = vmatprep.subr.mxu0 0.0
    %288 = vmatpush1.msra.mxu0 0.0
    %289 = vmatprep.subr.mxu0 0.0
    %290 = vmatpush1.msra.mxu0 0.0
    %291 = vmatprep.subr.mxu0 0.0
    %292 = vmatpush1.msra.mxu0 0.0
    %293 = vmatprep.subr.mxu0 0.0
    %294 = vmatpush1.msra.mxu0 %v186
    %295 = vmatprep.subr.mxu0 0.0
    %296 = vmatpush1.msra.mxu0 %v185
    %297 = vmatprep.subr.mxu0 0.0
    %298 = vmatpush1.msra.mxu0 %v184
    %299 = vmatprep.subr.mxu0 0.0
    %300 = vmatpush1.msra.mxu0 %v183
    %301 = vmatprep.subr.mxu0 0.0
    %302 = vmatpush2.msra.mxu0 0.0
    %303 = vmatprep.subr.mxu0 0.0
    %304 = vmatpush2.msra.mxu0 0.0
    %305 = vmatprep.subr.mxu0 0.0
    %306 = vmatpush2.msra.mxu0 0.0
    %307 = vmatprep.subr.mxu0 0.0
    %308 = vmatpush2.msra.mxu0 0.0
    %309 = vmatprep.subr.mxu0 0.0
    %310 = vmatpush2.msra.mxu0 0.0
    %311 = vmatprep.subr.mxu0 0.0
    %312 = vmatpush2.msra.mxu0 0.0
    %313 = vmatprep.subr.mxu0 0.0
    %314 = vmatpush2.msra.mxu0 0.0
    %315 = vmatprep.subr.mxu0 0.0
    %316 = vmatpush2.msra.mxu0 0.0
    %317 = vmatprep.subr.mxu0 0.0
    %318 = vmatpush2.msra.mxu0 0.0
    %319 = vmatprep.subr.mxu0 0.0
    %320 = vmatpush2.msra.mxu0 0.0
    %321 = vmatprep.subr.mxu0 0.0
    %322 = vmatpush2.msra.mxu0 0.0
    %323 = vmatprep.subr.mxu0 0.0
    %324 = vmatpush2.msra.mxu0 0.0
    %325 = vmatprep.subr.mxu0 0.0
    %326 = vmatpush2.msra.mxu0 0.0
    %327 = vmatprep.subr.mxu0 0.0
    %328 = vmatpush2.msra.mxu0 0.0
    %329 = vmatprep.subr.mxu0 0.0
    %330 = vmatpush2.msra.mxu0 0.0
    %331 = vmatprep.subr.mxu0 0.0
    %332 = vmatpush2.msra.mxu0 0.0
    %333 = vmatprep.mubr.f32.mxu0 0.0
    %334 = vmatmul.mubr.f32.gmra.mxu0 %v267
    %v335 = vpop.f32.mrf.mxu0
    %v336 = vadd.f32 0.0, %v335
    %v337 = vpop.f32.mrf.mxu0
    %338 = vdwg.mxu0
    %v339 = vadd.f32 %v265, %v336
    %v340 = vtanh.pop %v339
    %341 = vst.msk [vmem:[#allocation4 + $0x4] sm:$0x3] %vm181, %v340
    %v342 = vld [vmem:[#allocation3 + $0x4] sm:$0x3]
    %v344 = vsel %vm96, %v340, 0
    %346 = vmatprep.subr.mxu0 0.0
    %347 = vmatpush1.msra.mxu0 0.0
    %348 = vmatprep.subr.mxu0 0.0
    %349 = vmatpush1.msra.mxu0 0.0
    %350 = vmatprep.subr.mxu0 0.0
    %351 = vmatpush1.msra.mxu0 0.0
    %352 = vmatprep.subr.mxu0 0.0
    %353 = vmatpush1.msra.mxu0 0.0
    %354 = vmatprep.subr.mxu0 0.0
    %355 = vmatpush1.msra.mxu0 0.0
    %356 = vmatprep.subr.mxu0 0.0
    %357 = vmatpush1.msra.mxu0 0.0
    %358 = vmatprep.subr.mxu0 0.0
    %359 = vmatpush1.msra.mxu0 0.0
    %360 = vmatprep.subr.mxu0 0.0
    %361 = vmatpush1.msra.mxu0 0.0
    %362 = vmatprep.subr.mxu0 0.0
    %363 = vmatpush1.msra.mxu0 0.0
    %364 = vmatprep.subr.mxu0 0.0
    %365 = vmatpush1.msra.mxu0 0.0
    %366 = vmatprep.subr.mxu0 0.0
    %367 = vmatpush1.msra.mxu0 0.0
    %368 = vmatprep.subr.mxu0 0.0
    %369 = vmatpush1.msra.mxu0 0.0
    %370 = vmatprep.subr.mxu0 0.0
    %371 = vmatpush1.msra.mxu0 %v186
    %372 = vmatprep.subr.mxu0 0.0
    %373 = vmatpush1.msra.mxu0 %v185
    %374 = vmatprep.subr.mxu0 0.0
    %375 = vmatpush1.msra.mxu0 %v184
    %376 = vmatprep.subr.mxu0 0.0
    %377 = vmatpush1.msra.mxu0 %v183
    %378 = vmatprep.subr.mxu0 0.0
    %379 = vmatpush2.msra.mxu0 0.0
    %380 = vmatprep.subr.mxu0 0.0
    %381 = vmatpush2.msra.mxu0 0.0
    %382 = vmatprep.subr.mxu0 0.0
    %383 = vmatpush2.msra.mxu0 0.0
    %384 = vmatprep.subr.mxu0 0.0
    %385 = vmatpush2.msra.mxu0 0.0
    %386 = vmatprep.subr.mxu0 0.0
    %387 = vmatpush2.msra.mxu0 0.0
    %388 = vmatprep.subr.mxu0 0.0
    %389 = vmatpush2.msra.mxu0 0.0
    %390 = vmatprep.subr.mxu0 0.0
    %391 = vmatpush2.msra.mxu0 0.0
    %392 = vmatprep.subr.mxu0 0.0
    %393 = vmatpush2.msra.mxu0 0.0
    %394 = vmatprep.subr.mxu0 0.0
    %395 = vmatpush2.msra.mxu0 0.0
    %396 = vmatprep.subr.mxu0 0.0
    %397 = vmatpush2.msra.mxu0 0.0
    %398 = vmatprep.subr.mxu0 0.0
    %399 = vmatpush2.msra.mxu0 0.0
    %400 = vmatprep.subr.mxu0 0.0
    %401 = vmatpush2.msra.mxu0 0.0
    %402 = vmatprep.subr.mxu0 0.0
    %403 = vmatpush2.msra.mxu0 0.0
    %404 = vmatprep.subr.mxu0 0.0
    %405 = vmatpush2.msra.mxu0 0.0
    %406 = vmatprep.subr.mxu0 0.0
    %407 = vmatpush2.msra.mxu0 0.0
    %408 = vmatprep.subr.mxu0 0.0
    %409 = vmatpush2.msra.mxu0 0.0
    %410 = vmatprep.mubr.f32.mxu0 0.0
    %411 = vmatmul.mubr.f32.gmra.mxu0 %v344
    %v412 = vpop.f32.mrf.mxu0
    %v413 = vadd.f32 0.0, %v412
    %v414 = vpop.f32.mrf.mxu0
    %415 = vdwg.mxu0
    %v416 = vadd.f32 %v342, %v413
    %v417 = vtanh.pop %v416
    %418 = vst.msk [vmem:[#allocation4 + $0x6] sm:$0x3] %vm181, %v417
    %v419 = vld [vmem:[#allocation3 + $0x6] sm:$0x3]
    %v421 = vsel %vm96, %v417, 0
    %423 = vmatprep.subr.mxu0 0.0
    %424 = vmatpush1.msra.mxu0 0.0
    %425 = vmatprep.subr.mxu0 0.0
    %426 = vmatpush1.msra.mxu0 0.0
    %427 = vmatprep.subr.mxu0 0.0
    %428 = vmatpush1.msra.mxu0 0.0
    %429 = vmatprep.subr.mxu0 0.0
    %430 = vmatpush1.msra.mxu0 0.0
    %431 = vmatprep.subr.mxu0 0.0
    %432 = vmatpush1.msra.mxu0 0.0
    %433 = vmatprep.subr.mxu0 0.0
    %434 = vmatpush1.msra.mxu0 0.0
    %435 = vmatprep.subr.mxu0 0.0
    %436 = vmatpush1.msra.mxu0 0.0
    %437 = vmatprep.subr.mxu0 0.0
    %438 = vmatpush1.msra.mxu0 0.0
    %439 = vmatprep.subr.mxu0 0.0
    %440 = vmatpush1.msra.mxu0 0.0
    %441 = vmatprep.subr.mxu0 0.0
    %442 = vmatpush1.msra.mxu0 0.0
    %443 = vmatprep.subr.mxu0 0.0
    %444 = vmatpush1.msra.mxu0 0.0
    %445 = vmatprep.subr.mxu0 0.0
    %446 = vmatpush1.msra.mxu0 0.0
    %447 = vmatprep.subr.mxu0 0.0
    %448 = vmatpush1.msra.mxu0 %v186
    %449 = vmatprep.subr.mxu0 0.0
    %450 = vmatpush1.msra.mxu0 %v185
    %451 = vmatprep.subr.mxu0 0.0
    %452 = vmatpush1.msra.mxu0 %v184
    %453 = vmatprep.subr.mxu0 0.0
    %454 = vmatpush1.msra.mxu0 %v183
    %455 = vmatprep.subr.mxu0 0.0
    %456 = vmatpush2.msra.mxu0 0.0
    %457 = vmatprep.subr.mxu0 0.0
    %458 = vmatpush2.msra.mxu0 0.0
    %459 = vmatprep.subr.mxu0 0.0
    %460 = vmatpush2.msra.mxu0 0.0
    %461 = vmatprep.subr.mxu0 0.0
    %462 = vmatpush2.msra.mxu0 0.0
    %463 = vmatprep.subr.mxu0 0.0
    %464 = vmatpush2.msra.mxu0 0.0
    %465 = vmatprep.subr.mxu0 0.0
    %466 = vmatpush2.msra.mxu0 0.0
    %467 = vmatprep.subr.mxu0 0.0
    %468 = vmatpush2.msra.mxu0 0.0
    %469 = vmatprep.subr.mxu0 0.0
    %470 = vmatpush2.msra.mxu0 0.0
    %471 = vmatprep.subr.mxu0 0.0
    %472 = vmatpush2.msra.mxu0 0.0
    %473 = vmatprep.subr.mxu0 0.0
    %474 = vmatpush2.msra.mxu0 0.0
    %475 = vmatprep.subr.mxu0 0.0
    %476 = vmatpush2.msra.mxu0 0.0
    %477 = vmatprep.subr.mxu0 0.0
    %478 = vmatpush2.msra.mxu0 0.0
    %479 = vmatprep.subr.mxu0 0.0
    %480 = vmatpush2.msra.mxu0 0.0
    %481 = vmatprep.subr.mxu0 0.0
    %482 = vmatpush2.msra.mxu0 0.0
    %483 = vmatprep.subr.mxu0 0.0
    %484 = vmatpush2.msra.mxu0 0.0
    %485 = vmatprep.subr.mxu0 0.0
    %486 = vmatpush2.msra.mxu0 0.0
    %487 = vmatprep.mubr.f32.mxu0 0.0
    %488 = vmatmul.mubr.f32.gmra.mxu0 %v421
    %v489 = vpop.f32.mrf.mxu0
    %v490 = vadd.f32 0.0, %v489
    %v491 = vpop.f32.mrf.mxu0
    %492 = vdwg.mxu0
    %v493 = vadd.f32 %v419, %v490
    %v494 = vtanh.pop %v493
    %495 = vst.msk [vmem:[#allocation4 + $0x8] sm:$0x3] %vm181, %v494
    %v496 = vld [vmem:[#allocation3 + $0x8] sm:$0x3]
    %v498 = vsel %vm96, %v494, 0
    %500 = vmatprep.subr.mxu0 0.0
    %501 = vmatpush1.msra.mxu0 0.0
    %502 = vmatprep.subr.mxu0 0.0
    %503 = vmatpush1.msra.mxu0 0.0
    %504 = vmatprep.subr.mxu0 0.0
    %505 = vmatpush1.msra.mxu0 0.0
    %506 = vmatprep.subr.mxu0 0.0
    %507 = vmatpush1.msra.mxu0 0.0
    %508 = vmatprep.subr.mxu0 0.0
    %509 = vmatpush1.msra.mxu0 0.0
    %510 = vmatprep.subr.mxu0 0.0
    %511 = vmatpush1.msra.mxu0 0.0
    %512 = vmatprep.subr.mxu0 0.0
    %513 = vmatpush1.msra.mxu0 0.0
    %514 = vmatprep.subr.mxu0 0.0
    %515 = vmatpush1.msra.mxu0 0.0
    %516 = vmatprep.subr.mxu0 0.0
    %517 = vmatpush1.msra.mxu0 0.0
    %518 = vmatprep.subr.mxu0 0.0
    %519 = vmatpush1.msra.mxu0 0.0
    %520 = vmatprep.subr.mxu0 0.0
    %521 = vmatpush1.msra.mxu0 0.0
    %522 = vmatprep.subr.mxu0 0.0
    %523 = vmatpush1.msra.mxu0 0.0
    %524 = vmatprep.subr.mxu0 0.0
    %525 = vmatpush1.msra.mxu0 %v186
    %526 = vmatprep.subr.mxu0 0.0
    %527 = vmatpush1.msra.mxu0 %v185
    %528 = vmatprep.subr.mxu0 0.0
    %529 = vmatpush1.msra.mxu0 %v184
    %530 = vmatprep.subr.mxu0 0.0
    %531 = vmatpush1.msra.mxu0 %v183
    %532 = vmatprep.subr.mxu0 0.0
    %533 = vmatpush2.msra.mxu0 0.0
    %534 = vmatprep.subr.mxu0 0.0
    %535 = vmatpush2.msra.mxu0 0.0
    %536 = vmatprep.subr.mxu0 0.0
    %537 = vmatpush2.msra.mxu0 0.0
    %538 = vmatprep.subr.mxu0 0.0
    %539 = vmatpush2.msra.mxu0 0.0
    %540 = vmatprep.subr.mxu0 0.0
    %541 = vmatpush2.msra.mxu0 0.0
    %542 = vmatprep.subr.mxu0 0.0
    %543 = vmatpush2.msra.mxu0 0.0
    %544 = vmatprep.subr.mxu0 0.0
    %545 = vmatpush2.msra.mxu0 0.0
    %546 = vmatprep.subr.mxu0 0.0
    %547 = vmatpush2.msra.mxu0 0.0
    %548 = vmatprep.subr.mxu0 0.0
    %549 = vmatpush2.msra.mxu0 0.0
    %550 = vmatprep.subr.mxu0 0.0
    %551 = vmatpush2.msra.mxu0 0.0
    %552 = vmatprep.subr.mxu0 0.0
    %553 = vmatpush2.msra.mxu0 0.0
    %554 = vmatprep.subr.mxu0 0.0
    %555 = vmatpush2.msra.mxu0 0.0
    %556 = vmatprep.subr.mxu0 0.0
    %557 = vmatpush2.msra.mxu0 0.0
    %558 = vmatprep.subr.mxu0 0.0
    %559 = vmatpush2.msra.mxu0 0.0
    %560 = vmatprep.subr.mxu0 0.0
    %561 = vmatpush2.msra.mxu0 0.0
    %562 = vmatprep.subr.mxu0 0.0
    %563 = vmatpush2.msra.mxu0 0.0
    %564 = vmatprep.mubr.f32.mxu0 0.0
    %565 = vmatmul.mubr.f32.gmra.mxu0 %v498
    %v566 = vpop.f32.mrf.mxu0
    %v567 = vadd.f32 0.0, %v566
    %v568 = vpop.f32.mrf.mxu0
    %569 = vdwg.mxu0
    %v570 = vadd.f32 %v496, %v567
    %v571 = vtanh.pop %v570
    %572 = vst.msk [vmem:[#allocation4 + $0xa] sm:$0x3] %vm181, %v571
    %v573 = vld [vmem:[#allocation3 + $0xa] sm:$0x3]
    %v575 = vsel %vm96, %v571, 0
    %577 = vmatprep.subr.mxu0 0.0
    %578 = vmatpush1.msra.mxu0 0.0
    %579 = vmatprep.subr.mxu0 0.0
    %580 = vmatpush1.msra.mxu0 0.0
    %581 = vmatprep.subr.mxu0 0.0
    %582 = vmatpush1.msra.mxu0 0.0
    %583 = vmatprep.subr.mxu0 0.0
    %584 = vmatpush1.msra.mxu0 0.0
    %585 = vmatprep.subr.mxu0 0.0
    %586 = vmatpush1.msra.mxu0 0.0
    %587 = vmatprep.subr.mxu0 0.0
    %588 = vmatpush1.msra.mxu0 0.0
    %589 = vmatprep.subr.mxu0 0.0
    %590 = vmatpush1.msra.mxu0 0.0
    %591 = vmatprep.subr.mxu0 0.0
    %592 = vmatpush1.msra.mxu0 0.0
    %593 = vmatprep.subr.mxu0 0.0
    %594 = vmatpush1.msra.mxu0 0.0
    %595 = vmatprep.subr.mxu0 0.0
    %596 = vmatpush1.msra.mxu0 0.0
    %597 = vmatprep.subr.mxu0 0.0
    %598 = vmatpush1.msra.mxu0 0.0
    %599 = vmatprep.subr.mxu0 0.0
    %600 = vmatpush1.msra.mxu0 0.0
    %601 = vmatprep.subr.mxu0 0.0
    %602 = vmatpush1.msra.mxu0 %v186
    %603 = vmatprep.subr.mxu0 0.0
    %604 = vmatpush1.msra.mxu0 %v185
    %605 = vmatprep.subr.mxu0 0.0
    %606 = vmatpush1.msra.mxu0 %v184
    %607 = vmatprep.subr.mxu0 0.0
    %608 = vmatpush1.msra.mxu0 %v183
    %609 = vmatprep.subr.mxu0 0.0
    %610 = vmatpush2.msra.mxu0 0.0
    %611 = vmatprep.subr.mxu0 0.0
    %612 = vmatpush2.msra.mxu0 0.0
    %613 = vmatprep.subr.mxu0 0.0
    %614 = vmatpush2.msra.mxu0 0.0
    %615 = vmatprep.subr.mxu0 0.0
    %616 = vmatpush2.msra.mxu0 0.0
    %617 = vmatprep.subr.mxu0 0.0
    %618 = vmatpush2.msra.mxu0 0.0
    %619 = vmatprep.subr.mxu0 0.0
    %620 = vmatpush2.msra.mxu0 0.0
    %621 = vmatprep.subr.mxu0 0.0
    %622 = vmatpush2.msra.mxu0 0.0
    %623 = vmatprep.subr.mxu0 0.0
    %624 = vmatpush2.msra.mxu0 0.0
    %625 = vmatprep.subr.mxu0 0.0
    %626 = vmatpush2.msra.mxu0 0.0
    %627 = vmatprep.subr.mxu0 0.0
    %628 = vmatpush2.msra.mxu0 0.0
    %629 = vmatprep.subr.mxu0 0.0
    %630 = vmatpush2.msra.mxu0 0.0
    %631 = vmatprep.subr.mxu0 0.0
    %632 = vmatpush2.msra.mxu0 0.0
    %633 = vmatprep.subr.mxu0 0.0
    %634 = vmatpush2.msra.mxu0 0.0
    %635 = vmatprep.subr.mxu0 0.0
    %636 = vmatpush2.msra.mxu0 0.0
    %637 = vmatprep.subr.mxu0 0.0
    %638 = vmatpush2.msra.mxu0 0.0
    %639 = vmatprep.subr.mxu0 0.0
    %640 = vmatpush2.msra.mxu0 0.0
    %641 = vmatprep.mubr.f32.mxu0 0.0
    %642 = vmatmul.mubr.f32.gmra.mxu0 %v575
    %v643 = vpop.f32.mrf.mxu0
    %v644 = vadd.f32 0.0, %v643
    %v645 = vpop.f32.mrf.mxu0
    %646 = vdwg.mxu0
    %v647 = vadd.f32 %v573, %v644
    %v648 = vtanh.pop %v647
    %649 = vst.msk [vmem:[#allocation4 + $0xc] sm:$0x3] %vm181, %v648
    %v650 = vld [vmem:[#allocation3 + $0xc] sm:$0x3]
    %v652 = vsel %vm96, %v648, 0
    %654 = vmatprep.subr.mxu0 0.0
    %655 = vmatpush1.msra.mxu0 0.0
    %656 = vmatprep.subr.mxu0 0.0
    %657 = vmatpush1.msra.mxu0 0.0
    %658 = vmatprep.subr.mxu0 0.0
    %659 = vmatpush1.msra.mxu0 0.0
    %660 = vmatprep.subr.mxu0 0.0
    %661 = vmatpush1.msra.mxu0 0.0
    %662 = vmatprep.subr.mxu0 0.0
    %663 = vmatpush1.msra.mxu0 0.0
    %664 = vmatprep.subr.mxu0 0.0
    %665 = vmatpush1.msra.mxu0 0.0
    %666 = vmatprep.subr.mxu0 0.0
    %667 = vmatpush1.msra.mxu0 0.0
    %668 = vmatprep.subr.mxu0 0.0
    %669 = vmatpush1.msra.mxu0 0.0
    %670 = vmatprep.subr.mxu0 0.0
    %671 = vmatpush1.msra.mxu0 0.0
    %672 = vmatprep.subr.mxu0 0.0
    %673 = vmatpush1.msra.mxu0 0.0
    %674 = vmatprep.subr.mxu0 0.0
    %675 = vmatpush1.msra.mxu0 0.0
    %676 = vmatprep.subr.mxu0 0.0
    %677 = vmatpush1.msra.mxu0 0.0
    %678 = vmatprep.subr.mxu0 0.0
    %679 = vmatpush1.msra.mxu0 %v186
    %680 = vmatprep.subr.mxu0 0.0
    %681 = vmatpush1.msra.mxu0 %v185
    %682 = vmatprep.subr.mxu0 0.0
    %683 = vmatpush1.msra.mxu0 %v184
    %684 = vmatprep.subr.mxu0 0.0
    %685 = vmatpush1.msra.mxu0 %v183
    %686 = vmatprep.subr.mxu0 0.0
    %687 = vmatpush2.msra.mxu0 0.0
    %688 = vmatprep.subr.mxu0 0.0
    %689 = vmatpush2.msra.mxu0 0.0
    %690 = vmatprep.subr.mxu0 0.0
    %691 = vmatpush2.msra.mxu0 0.0
    %692 = vmatprep.subr.mxu0 0.0
    %693 = vmatpush2.msra.mxu0 0.0
    %694 = vmatprep.subr.mxu0 0.0
    %695 = vmatpush2.msra.mxu0 0.0
    %696 = vmatprep.subr.mxu0 0.0
    %697 = vmatpush2.msra.mxu0 0.0
    %698 = vmatprep.subr.mxu0 0.0
    %699 = vmatpush2.msra.mxu0 0.0
    %700 = vmatprep.subr.mxu0 0.0
    %701 = vmatpush2.msra.mxu0 0.0
    %702 = vmatprep.subr.mxu0 0.0
    %703 = vmatpush2.msra.mxu0 0.0
    %704 = vmatprep.subr.mxu0 0.0
    %705 = vmatpush2.msra.mxu0 0.0
    %706 = vmatprep.subr.mxu0 0.0
    %707 = vmatpush2.msra.mxu0 0.0
    %708 = vmatprep.subr.mxu0 0.0
    %709 = vmatpush2.msra.mxu0 0.0
    %710 = vmatprep.subr.mxu0 0.0
    %711 = vmatpush2.msra.mxu0 0.0
    %712 = vmatprep.subr.mxu0 0.0
    %713 = vmatpush2.msra.mxu0 0.0
    %714 = vmatprep.subr.mxu0 0.0
    %715 = vmatpush2.msra.mxu0 0.0
    %716 = vmatprep.subr.mxu0 0.0
    %717 = vmatpush2.msra.mxu0 0.0
    %718 = vmatprep.mubr.f32.mxu0 0.0
    %719 = vmatmul.mubr.f32.gmra.mxu0 %v652
    %v720 = vpop.f32.mrf.mxu0
    %v721 = vadd.f32 0.0, %v720
    %v722 = vpop.f32.mrf.mxu0
    %723 = vdwg.mxu0
    %v724 = vadd.f32 %v650, %v721
    %v725 = vtanh.pop %v724
    %726 = vst.msk [vmem:[#allocation4 + $0xe] sm:$0x3] %vm181, %v725
    %v727 = vld [vmem:[#allocation3 + $0xe] sm:$0x3]
    %v729 = vsel %vm96, %v725, 0
    %731 = vmatprep.subr.mxu0 0.0
    %732 = vmatpush1.msra.mxu0 0.0
    %733 = vmatprep.subr.mxu0 0.0
    %734 = vmatpush1.msra.mxu0 0.0
    %735 = vmatprep.subr.mxu0 0.0
    %736 = vmatpush1.msra.mxu0 0.0
    %737 = vmatprep.subr.mxu0 0.0
    %738 = vmatpush1.msra.mxu0 0.0
    %739 = vmatprep.subr.mxu0 0.0
    %740 = vmatpush1.msra.mxu0 0.0
    %741 = vmatprep.subr.mxu0 0.0
    %742 = vmatpush1.msra.mxu0 0.0
    %743 = vmatprep.subr.mxu0 0.0
    %744 = vmatpush1.msra.mxu0 0.0
    %745 = vmatprep.subr.mxu0 0.0
    %746 = vmatpush1.msra.mxu0 0.0
    %747 = vmatprep.subr.mxu0 0.0
    %748 = vmatpush1.msra.mxu0 0.0
    %749 = vmatprep.subr.mxu0 0.0
    %750 = vmatpush1.msra.mxu0 0.0
    %751 = vmatprep.subr.mxu0 0.0
    %752 = vmatpush1.msra.mxu0 0.0
    %753 = vmatprep.subr.mxu0 0.0
    %754 = vmatpush1.msra.mxu0 0.0
    %755 = vmatprep.subr.mxu0 0.0
    %756 = vmatpush1.msra.mxu0 %v186
    %757 = vmatprep.subr.mxu0 0.0
    %758 = vmatpush1.msra.mxu0 %v185
    %759 = vmatprep.subr.mxu0 0.0
    %760 = vmatpush1.msra.mxu0 %v184
    %761 = vmatprep.subr.mxu0 0.0
    %762 = vmatpush1.msra.mxu0 %v183
    %763 = vmatprep.subr.mxu0 0.0
    %764 = vmatpush2.msra.mxu0 0.0
    %765 = vmatprep.subr.mxu0 0.0
    %766 = vmatpush2.msra.mxu0 0.0
    %767 = vmatprep.subr.mxu0 0.0
    %768 = vmatpush2.msra.mxu0 0.0
    %769 = vmatprep.subr.mxu0 0.0
    %770 = vmatpush2.msra.mxu0 0.0
    %771 = vmatprep.subr.mxu0 0.0
    %772 = vmatpush2.msra.mxu0 0.0
    %773 = vmatprep.subr.mxu0 0.0
    %774 = vmatpush2.msra.mxu0 0.0
    %775 = vmatprep.subr.mxu0 0.0
    %776 = vmatpush2.msra.mxu0 0.0
    %777 = vmatprep.subr.mxu0 0.0
    %778 = vmatpush2.msra.mxu0 0.0
    %779 = vmatprep.subr.mxu0 0.0
    %780 = vmatpush2.msra.mxu0 0.0
    %781 = vmatprep.subr.mxu0 0.0
    %782 = vmatpush2.msra.mxu0 0.0
    %783 = vmatprep.subr.mxu0 0.0
    %784 = vmatpush2.msra.mxu0 0.0
    %785 = vmatprep.subr.mxu0 0.0
    %786 = vmatpush2.msra.mxu0 0.0
    %787 = vmatprep.subr.mxu0 0.0
    %788 = vmatpush2.msra.mxu0 0.0
    %789 = vmatprep.subr.mxu0 0.0
    %790 = vmatpush2.msra.mxu0 0.0
    %791 = vmatprep.subr.mxu0 0.0
    %792 = vmatpush2.msra.mxu0 0.0
    %793 = vmatprep.subr.mxu0 0.0
    %794 = vmatpush2.msra.mxu0 0.0
    %795 = vmatprep.mubr.f32.mxu0 0.0
    %796 = vmatmul.mubr.f32.gmra.mxu0 %v729
    %v797 = vpop.f32.mrf.mxu0
    %v798 = vadd.f32 0.0, %v797
    %v799 = vpop.f32.mrf.mxu0
    %800 = vdwg.mxu0
    %v801 = vadd.f32 %v727, %v798
    %v802 = vtanh.pop %v801
    %803 = vst.msk [vmem:[#allocation4 + $0x10] sm:$0x3] %vm181, %v802
    %804 = vst.msk [vmem:[#allocation2] sm:$0x3] %vm181, %v802
    %v805 = vld [vmem:[#allocation4] sm:$0xff]
    %v806 = vld [vmem:[#allocation4 + $0x8] sm:$0xff]
    %v807 = vld [vmem:[#allocation4 + $0x2] sm:$0xff]
    %v808 = vld [vmem:[#allocation4 + $0xa] sm:$0xff]
    %809 = vst.msk [vmem:[#allocation13] sm:$0xff] %vm96, %v805
    %810 = vst.msk [vmem:[#allocation13 + $0x8] sm:$0xff] %vm96, %v806
    %v811 = vsub.f32 %v807, %v805
    %v812 = vsub.f32 %v808, %v806
    %v813 = vmul.f32 %v811, %v811
    %v814 = vmul.f32 %v812, %v812
    %v815 = vsel %vm96, %v813, 0.0
    %816 = vadd.xlane.f32.xlu0 %v815
    %v817 = vpop.xlane.xlu0 %816
    %v818 = vsel %vm96, %v814, 0.0
    %819 = vadd.xlane.f32.xlu0 %v818
    %v820 = vpop.xlane.xlu0 %819
    %vm821 = vcmask 7168
    %822 = vst.msk [vmem:[%s6] sm:$0xff] %vm821, %v817
    %823 = vst.msk [vmem:[%s6 + $0x8] sm:$0xff] %vm821, %v820
    // Predicated region
    $region42: #{tpu_custom_call.1} parent=1 // pred_check
      _
    $region43: #{tpu_custom_call.1} parent=1 // pred_check_branch
      %825 = sbr.rel (0) target = $region45
    $region44: #{tpu_custom_call.1} parent=1 // pred_region
      %s827 = ssub.s32 256, 256
      %828 = vsyncadd [#allocation7], %s827
      %s829 = sshll.u32 [#allocation13], 4
      %s830 = int_to_ptr.vmem [resolvable:$true] %s829
      %835 = dma.vmem_to_hbm [thread:$0]  %s830, 256, %s5, [#allocation7], 128, 128, 8
    $region45: #{tpu_custom_call.1} parent=1 // pred_fallthru
      _
    // Predicated region
    $region46: #{tpu_custom_call.1} parent=1 // pred_check
      _
    $region47: #{tpu_custom_call.1} parent=1 // pred_check_branch
      %837 = sbr.rel (0) target = $region49
    $region48: #{tpu_custom_call.1} parent=1 // pred_region
      _
    $region49: #{tpu_custom_call.1} parent=1 // pred_fallthru
      _
    // Predicated region
    $region50: #{tpu_custom_call.1} parent=1 // pred_check
      _
    $region51: #{tpu_custom_call.1} parent=1 // pred_check_branch
      %839 = sbr.rel (0) target = $region53
    $region52: #{tpu_custom_call.1} parent=1 // pred_region
      %840 = dma.done [#allocation7], 256
    $region53: #{tpu_custom_call.1} parent=1 // pred_fallthru
      _
    // Predicated region
    $region54: #{tpu_custom_call.1} parent=1 // pred_check
      _
    $region55: #{tpu_custom_call.1} parent=1 // pred_check_branch
      %842 = sbr.rel (0) target = $region57
    $region56: #{tpu_custom_call.1} parent=1 // pred_region
      _
    $region57: #{tpu_custom_call.1} parent=1 // pred_fallthru
      _
    %843 = vsyncpa [#allocation6], 1
    %844 = vsyncpa [#allocation9], 1
    %845 = vsyncpa [#allocation12], 1
    %846 = vsyncpa [#allocation7], 1

</llo_original>
